<compile_context>
chip_gen: v6e
topology: v6e:2x2x1
jax: 0.10.0
libtpu: 0.0.40
codegen_flags: <defaults>
</compile_context>

<pallas_src>
import functools
import math

import jax
import jax.numpy as jnp
from jax.experimental import pallas as pl
from jax.experimental.pallas import tpu as pltpu


# Row layout of the packed f32 parameter slab (width W = max(h1_dim, h2_dim)):
#   row 0: fc1 bias (h1)      row 1: BN gamma (h1)   row 2: BN beta (h1)
#   row 3: LN gamma (h1)      row 4: LN beta  (h1)   row 5: fc2 bias (h2)
#   row 6: fc3 weight row (h2)                        row 7: fc3 bias (1)
#   rows [8            : 8+in_dim        ] : w1x  = [[w1], [0]]       (in_dim, h1)
#   rows [8+in_dim     : 8+in_dim+h1     ] : w2a  = w2[:h1]           (h1,     h2)
#   rows [8+in_dim+h1  : 8+2*in_dim+h1   ] : w2xb = [[0], [w2[h1:]]]  (in_dim, h2)
# (in_dim = state_size + action_size; all row offsets are multiples of 8.)
_N_VEC_ROWS = 8


def _critic_kernel(x_ref, slab_ref, out_ref, *, in_dim, h1_dim, h2_dim):
    eps = 1e-5

    r_w1 = _N_VEC_ROWS
    r_w2a = r_w1 + in_dim
    r_w2b = r_w2a + h1_dim

    # Static slices of the single packed slab (one DMA for all parameters).
    b1   = slab_ref[0:1, :h1_dim]
    bn_g = slab_ref[1:2, :h1_dim]
    bn_b = slab_ref[2:3, :h1_dim]
    ln_g = slab_ref[3:4, :h1_dim]
    ln_b = slab_ref[4:5, :h1_dim]
    b2   = slab_ref[5:6, :h2_dim]
    w3r  = slab_ref[6:7, :h2_dim]
    b3   = slab_ref[7:8, 0:1]

    # MXU operands cast to bf16 at the dot sites; accumulation stays f32.
    w1x  = slab_ref[r_w1:r_w1 + in_dim, :h1_dim].astype(jnp.bfloat16)
    w2a  = slab_ref[r_w2a:r_w2a + h1_dim, :h2_dim].astype(jnp.bfloat16)
    w2xb = slab_ref[r_w2b:r_w2b + in_dim, :h2_dim].astype(jnp.bfloat16)

    x = x_ref[...]  # (B, S+A) bf16, packed [state | action] — no in-kernel slicing

    # fc1: action rows of w1x are zero, so x @ w1x == state @ w1.
    h1 = jnp.dot(x, w1x, preferred_element_type=jnp.float32) + b1

    # BatchNorm1d (training mode: batch mean/var over axis 0, biased variance).
    # One-pass stats (independent reductions); affine fused into scale/shift.
    mu_b = jnp.mean(h1, axis=0, keepdims=True)
    ms_b = jnp.mean(h1 * h1, axis=0, keepdims=True)
    var_b = jnp.maximum(ms_b - mu_b * mu_b, 0.0)
    scale_b = jax.lax.rsqrt(var_b + eps) * bn_g
    shift_b = bn_b - mu_b * scale_b
    h1 = h1 * scale_b + shift_b

    # LayerNorm over the feature axis (biased variance), one-pass stats.
    mu_l = jnp.mean(h1, axis=1, keepdims=True)
    ms_l = jnp.mean(h1 * h1, axis=1, keepdims=True)
    var_l = jnp.maximum(ms_l - mu_l * mu_l, 0.0)
    h1 = (h1 - mu_l) * jax.lax.rsqrt(var_l + eps)
    h1 = h1 * ln_g + ln_b

    s1 = jnp.maximum(h1, 0.0)

    # fc2 in split form (no lane-offset concat): state rows of w2xb are zero,
    # so s1 @ w2[:h1] + x @ w2xb == concat([s1, action]) @ w2.
    h2 = (jnp.dot(s1.astype(jnp.bfloat16), w2a, preferred_element_type=jnp.float32)
          + jnp.dot(x, w2xb, preferred_element_type=jnp.float32)
          + b2)
    h2 = jnp.maximum(h2, 0.0)

    # fc3 (output width 1): VPU broadcast-mul + lane reduction instead of an
    # N=1 MXU matmul (avoids an MXU push/pop for a single masked lane).
    out = jnp.sum(h2 * w3r, axis=1, keepdims=True) + b3
    out_ref[...] = out.astype(out_ref.dtype)


def critic_forward(state, action, params):
    """Runs the whole critic forward inside one Pallas kernel call."""
    batch = state.shape[0]
    slab = params["slab"]
    dims = params["dims"]

    # Pack + cast the activations once on the XLA side: one bf16 DMA read
    # into the kernel instead of two f32 reads.
    x = jnp.concatenate([state, action], axis=1).astype(jnp.bfloat16)

    vmem_spec = pl.BlockSpec(memory_space=pltpu.MemorySpace.VMEM)
    kernel = functools.partial(
        _critic_kernel,
        in_dim=dims["in_dim"], h1_dim=dims["h1_dim"], h2_dim=dims["h2_dim"])

    return pl.pallas_call(
        kernel,
        out_shape=jax.ShapeDtypeStruct((batch, 1), jnp.float32),
        in_specs=[vmem_spec, vmem_spec],
        out_specs=vmem_spec,
    )(x, slab)


def _xavier_uniform(key, fan_in, fan_out):
    # Matches torch.nn.init.xavier_uniform_ on a (fan_out, fan_in) weight;
    # returned transposed as (fan_in, fan_out) so the kernel computes x @ W.
    bound = math.sqrt(6.0 / (fan_in + fan_out))
    return jax.random.uniform(key, (fan_in, fan_out), jnp.float32,
                              minval=-bound, maxval=bound)


def _linear_bias(key, fan_in, fan_out):
    # PyTorch nn.Linear default bias init: U(-1/sqrt(fan_in), 1/sqrt(fan_in))
    bound = 1.0 / math.sqrt(fan_in)
    return jax.random.uniform(key, (fan_out,), jnp.float32,
                              minval=-bound, maxval=bound)


def init_critic_params(key, state_size, action_size, output_size=1):
    assert output_size == 1, "fc3 lane-reduction path assumes output_size == 1"
    h1_dim = 2 * state_size
    h2_dim = 2 * action_size
    in_dim = state_size + action_size
    keys = jax.random.split(key, 6)

    w1 = _xavier_uniform(keys[0], state_size, h1_dim)
    b1 = _linear_bias(keys[1], state_size, h1_dim)

    # fc2 takes concat([s1, action]) of width h1_dim + action_size.
    w2 = _xavier_uniform(keys[2], h1_dim + action_size, h2_dim)
    b2 = _linear_bias(keys[3], h1_dim + action_size, h2_dim)

    w3 = _xavier_uniform(keys[4], h2_dim, output_size)
    b3 = _linear_bias(keys[5], h2_dim, output_size)

    slab_w = max(h1_dim, h2_dim)

    def _vec_row(v):
        v = jnp.reshape(v, (-1,)).astype(jnp.float32)
        return jnp.pad(v, (0, slab_w - v.shape[0]))

    def _mat_rows(m):
        m = m.astype(jnp.float32)
        return jnp.pad(m, ((0, 0), (0, slab_w - m.shape[1])))

    vec_rows = jnp.stack([
        _vec_row(b1),                                   # row 0: fc1 bias
        _vec_row(jnp.ones((h1_dim,), jnp.float32)),     # row 1: BN gamma (default 1)
        _vec_row(jnp.zeros((h1_dim,), jnp.float32)),    # row 2: BN beta  (default 0)
        _vec_row(jnp.ones((h1_dim,), jnp.float32)),     # row 3: LN gamma (default 1)
        _vec_row(jnp.zeros((h1_dim,), jnp.float32)),    # row 4: LN beta  (default 0)
        _vec_row(b2),                                   # row 5: fc2 bias
        _vec_row(w3[:, 0]),                             # row 6: fc3 weight row
        _vec_row(b3),                                   # row 7: fc3 bias (scalar)
    ], axis=0)

    # Weights for the packed (B, state+action) input: zero rows fold the
    # state/action selection into the weight so no in-kernel slicing is needed.
    w1x = jnp.concatenate(
        [w1, jnp.zeros((action_size, h1_dim), jnp.float32)], axis=0)     # (in_dim, h1)
    w2a = w2[:h1_dim]                                                    # (h1, h2)
    w2xb = jnp.concatenate(
        [jnp.zeros((state_size, h2_dim), jnp.float32), w2[h1_dim:]], axis=0)  # (in_dim, h2)

    slab = jnp.concatenate([
        vec_rows,          # rows [0 : 8)
        _mat_rows(w1x),    # rows [8 : 8+in_dim)
        _mat_rows(w2a),    # rows [8+in_dim : 8+in_dim+h1)
        _mat_rows(w2xb),   # rows [8+in_dim+h1 : 8+2*in_dim+h1)
    ], axis=0)

    return {
        "slab": slab,  # one f32 slab -> one DMA for all parameters
        "dims": {"state_size": state_size, "action_size": action_size,
                 "in_dim": in_dim, "h1_dim": h1_dim, "h2_dim": h2_dim},
    }


if __name__ == "__main__":
    batch = 8
    state_size = 16
    action_size = 8

    key = jax.random.PRNGKey(0)
    k_params, k_state, k_action = jax.random.split(key, 3)

    params = init_critic_params(k_params, state_size, action_size)
    state = jax.random.normal(k_state, (batch, state_size), jnp.float32)
    action = jax.random.normal(k_action, (batch, action_size), jnp.float32)

    q = critic_forward(state, action, params)
    jax.block_until_ready(q)
    assert q.shape == (batch, 1)
    print("KERNEL_OK")
</pallas_src>

<mosaic_0001>
module attributes {stable_mosaic.version = 11 : i64} {
  func.func @_critic_kernel(%arg0: memref<8x24xbf16, #tpu.memory_space<vmem>>, %arg1: memref<88x32xf32, #tpu.memory_space<vmem>>, %arg2: memref<8x1xf32, #tpu.memory_space<vmem>>) attributes {dimension_semantics = [], scalar_prefetch = 0 : i64, scratch_operands = 0 : i64, tpu.core_type = #tpu.core_type<tc>} {
    %c0 = arith.constant 0 : index
    %c0_0 = arith.constant 0 : index
    %0 = vector.load %arg1[%c0, %c0_0] : memref<88x32xf32, #tpu.memory_space<vmem>>, vector<1x32xf32>
    %c1 = arith.constant 1 : index
    %c0_1 = arith.constant 0 : index
    %1 = vector.load %arg1[%c1, %c0_1] : memref<88x32xf32, #tpu.memory_space<vmem>>, vector<1x32xf32>
    %c2 = arith.constant 2 : index
    %c0_2 = arith.constant 0 : index
    %2 = vector.load %arg1[%c2, %c0_2] : memref<88x32xf32, #tpu.memory_space<vmem>>, vector<1x32xf32>
    %c3 = arith.constant 3 : index
    %c0_3 = arith.constant 0 : index
    %3 = vector.load %arg1[%c3, %c0_3] : memref<88x32xf32, #tpu.memory_space<vmem>>, vector<1x32xf32>
    %c4 = arith.constant 4 : index
    %c0_4 = arith.constant 0 : index
    %4 = vector.load %arg1[%c4, %c0_4] : memref<88x32xf32, #tpu.memory_space<vmem>>, vector<1x32xf32>
    %c5 = arith.constant 5 : index
    %c0_5 = arith.constant 0 : index
    %5 = vector.load %arg1[%c5, %c0_5] : memref<88x32xf32, #tpu.memory_space<vmem>>, vector<1x16xf32>
    %c6 = arith.constant 6 : index
    %c0_6 = arith.constant 0 : index
    %6 = vector.load %arg1[%c6, %c0_6] : memref<88x32xf32, #tpu.memory_space<vmem>>, vector<1x16xf32>
    %c7 = arith.constant 7 : index
    %c0_7 = arith.constant 0 : index
    %7 = vector.load %arg1[%c7, %c0_7] : memref<88x32xf32, #tpu.memory_space<vmem>>, vector<1x1xf32>
    %c8 = arith.constant 8 : index
    %c0_8 = arith.constant 0 : index
    %8 = vector.load %arg1[%c8, %c0_8] : memref<88x32xf32, #tpu.memory_space<vmem>>, vector<24x32xf32>
    %9 = arith.truncf %8 : vector<24x32xf32> to vector<24x32xbf16>
    %c32 = arith.constant 32 : index
    %c0_9 = arith.constant 0 : index
    %10 = vector.load %arg1[%c32, %c0_9] : memref<88x32xf32, #tpu.memory_space<vmem>>, vector<32x16xf32>
    %11 = arith.truncf %10 : vector<32x16xf32> to vector<32x16xbf16>
    %c64 = arith.constant 64 : index
    %c0_10 = arith.constant 0 : index
    %12 = vector.load %arg1[%c64, %c0_10] : memref<88x32xf32, #tpu.memory_space<vmem>>, vector<24x16xf32>
    %13 = arith.truncf %12 : vector<24x16xf32> to vector<24x16xbf16>
    %c0_11 = arith.constant 0 : index
    %c0_12 = arith.constant 0 : index
    %14 = vector.load %arg0[%c0_11, %c0_12] : memref<8x24xbf16, #tpu.memory_space<vmem>>, vector<8x24xbf16>
    %cst = arith.constant dense<0.000000e+00> : vector<8x32xf32>
    %15 = tpu.matmul %14, %9, %cst {dimension_numbers = #tpu.dot_dimension_numbers<[1], [0], [0], [1], [0, 0, 1, 1], [], []>} : vector<8x24xbf16>, vector<24x32xbf16>, vector<8x32xf32> -> vector<8x32xf32>
    %16 = vector.broadcast %0 : vector<1x32xf32> to vector<8x32xf32>
    %17 = arith.addf %15, %16 : vector<8x32xf32>
    %cst_13 = arith.constant dense<0.000000e+00> : vector<32xf32>
    %18 = vector.multi_reduction <add>, %17, %cst_13 [0] : vector<8x32xf32> to vector<32xf32>
    %19 = vector.shape_cast %18 : vector<32xf32> to vector<1x32xf32>
    %cst_14 = arith.constant 8.000000e+00 : f32
    %20 = vector.broadcast %cst_14 : f32 to vector<1x32xf32>
    %21 = arith.divf %19, %20 : vector<1x32xf32>
    %22 = arith.mulf %17, %17 : vector<8x32xf32>
    %cst_15 = arith.constant dense<0.000000e+00> : vector<32xf32>
    %23 = vector.multi_reduction <add>, %22, %cst_15 [0] : vector<8x32xf32> to vector<32xf32>
    %24 = vector.shape_cast %23 : vector<32xf32> to vector<1x32xf32>
    %cst_16 = arith.constant 8.000000e+00 : f32
    %25 = vector.broadcast %cst_16 : f32 to vector<1x32xf32>
    %26 = arith.divf %24, %25 : vector<1x32xf32>
    %27 = arith.mulf %21, %21 : vector<1x32xf32>
    %28 = arith.subf %26, %27 : vector<1x32xf32>
    %cst_17 = arith.constant 0.000000e+00 : f32
    %29 = vector.broadcast %cst_17 : f32 to vector<1x32xf32>
    %30 = arith.maximumf %28, %29 : vector<1x32xf32>
    %cst_18 = arith.constant 9.99999974E-6 : f32
    %31 = vector.broadcast %cst_18 : f32 to vector<1x32xf32>
    %32 = arith.addf %30, %31 : vector<1x32xf32>
    %33 = math.rsqrt %32 : vector<1x32xf32>
    %34 = arith.mulf %33, %1 : vector<1x32xf32>
    %35 = arith.mulf %21, %34 : vector<1x32xf32>
    %36 = arith.subf %2, %35 : vector<1x32xf32>
    %37 = vector.broadcast %34 : vector<1x32xf32> to vector<8x32xf32>
    %38 = arith.mulf %17, %37 : vector<8x32xf32>
    %39 = vector.broadcast %36 : vector<1x32xf32> to vector<8x32xf32>
    %40 = arith.addf %38, %39 : vector<8x32xf32>
    %cst_19 = arith.constant dense<0.000000e+00> : vector<8xf32>
    %41 = vector.multi_reduction <add>, %40, %cst_19 [1] : vector<8x32xf32> to vector<8xf32>
    %42 = vector.shape_cast %41 : vector<8xf32> to vector<8x1xf32>
    %cst_20 = arith.constant 3.200000e+01 : f32
    %43 = vector.broadcast %cst_20 : f32 to vector<8x1xf32>
    %44 = arith.divf %42, %43 : vector<8x1xf32>
    %45 = arith.mulf %40, %40 : vector<8x32xf32>
    %cst_21 = arith.constant dense<0.000000e+00> : vector<8xf32>
    %46 = vector.multi_reduction <add>, %45, %cst_21 [1] : vector<8x32xf32> to vector<8xf32>
    %47 = vector.shape_cast %46 : vector<8xf32> to vector<8x1xf32>
    %cst_22 = arith.constant 3.200000e+01 : f32
    %48 = vector.broadcast %cst_22 : f32 to vector<8x1xf32>
    %49 = arith.divf %47, %48 : vector<8x1xf32>
    %50 = arith.mulf %44, %44 : vector<8x1xf32>
    %51 = arith.subf %49, %50 : vector<8x1xf32>
    %cst_23 = arith.constant 0.000000e+00 : f32
    %52 = vector.broadcast %cst_23 : f32 to vector<8x1xf32>
    %53 = arith.maximumf %51, %52 : vector<8x1xf32>
    %54 = vector.broadcast %44 : vector<8x1xf32> to vector<8x32xf32>
    %55 = arith.subf %40, %54 : vector<8x32xf32>
    %cst_24 = arith.constant 9.99999974E-6 : f32
    %56 = vector.broadcast %cst_24 : f32 to vector<8x1xf32>
    %57 = arith.addf %53, %56 : vector<8x1xf32>
    %58 = math.rsqrt %57 : vector<8x1xf32>
    %59 = vector.broadcast %58 : vector<8x1xf32> to vector<8x32xf32>
    %60 = arith.mulf %55, %59 : vector<8x32xf32>
    %61 = vector.broadcast %3 : vector<1x32xf32> to vector<8x32xf32>
    %62 = arith.mulf %60, %61 : vector<8x32xf32>
    %63 = vector.broadcast %4 : vector<1x32xf32> to vector<8x32xf32>
    %64 = arith.addf %62, %63 : vector<8x32xf32>
    %cst_25 = arith.constant 0.000000e+00 : f32
    %65 = vector.broadcast %cst_25 : f32 to vector<8x32xf32>
    %66 = arith.maximumf %64, %65 : vector<8x32xf32>
    %67 = arith.truncf %66 : vector<8x32xf32> to vector<8x32xbf16>
    %cst_26 = arith.constant dense<0.000000e+00> : vector<8x16xf32>
    %68 = tpu.matmul %67, %11, %cst_26 {dimension_numbers = #tpu.dot_dimension_numbers<[1], [0], [0], [1], [0, 0, 1, 1], [], []>} : vector<8x32xbf16>, vector<32x16xbf16>, vector<8x16xf32> -> vector<8x16xf32>
    %cst_27 = arith.constant dense<0.000000e+00> : vector<8x16xf32>
    %69 = tpu.matmul %14, %13, %cst_27 {dimension_numbers = #tpu.dot_dimension_numbers<[1], [0], [0], [1], [0, 0, 1, 1], [], []>} : vector<8x24xbf16>, vector<24x16xbf16>, vector<8x16xf32> -> vector<8x16xf32>
    %70 = arith.addf %68, %69 : vector<8x16xf32>
    %71 = vector.broadcast %5 : vector<1x16xf32> to vector<8x16xf32>
    %72 = arith.addf %70, %71 : vector<8x16xf32>
    %cst_28 = arith.constant 0.000000e+00 : f32
    %73 = vector.broadcast %cst_28 : f32 to vector<8x16xf32>
    %74 = arith.maximumf %72, %73 : vector<8x16xf32>
    %75 = vector.broadcast %6 : vector<1x16xf32> to vector<8x16xf32>
    %76 = arith.mulf %74, %75 : vector<8x16xf32>
    %cst_29 = arith.constant dense<0.000000e+00> : vector<8xf32>
    %77 = vector.multi_reduction <add>, %76, %cst_29 [1] : vector<8x16xf32> to vector<8xf32>
    %78 = vector.shape_cast %77 : vector<8xf32> to vector<8x1xf32>
    %79 = vector.broadcast %7 : vector<1x1xf32> to vector<8x1xf32>
    %80 = arith.addf %78, %79 : vector<8x1xf32>
    %c0_30 = arith.constant 0 : index
    %c0_31 = arith.constant 0 : index
    %81 = vector.load %arg2[%c0_30, %c0_31] : memref<8x1xf32, #tpu.memory_space<vmem>>, vector<8x1xf32>
    tpu.vector_store %arg2[%c0_30, %c0_31], %80 {strides = array<i32>} : memref<8x1xf32, #tpu.memory_space<vmem>>, vector<8x1xf32>,
    return
  }
}

</mosaic_0001>

<llo_original>
// kernel: tpu_custom_call.1
$region0: #{tpu_custom_call.1}
  #allocation0 [shape = 'u32[]', space=smem, size = 0x4, offset = 0x4, fixed_abs, tag = 'smem constant byte address 0x4 - core index']
  #allocation1 [shape = 'u32[144,128]{1,0:T(1,128)}', space=vmem, size = 0x12000, scoped, tag = 'internal scratch']
  %s0 = inlined_call_operand.vmem [shape: bf16[8,24], index: 0, kind: input, shape index: {}]
  %s1 = inlined_call_operand.vmem [shape: f32[88,32], index: 1, kind: input, shape index: {}]
  %s2 = inlined_call_operand.vmem [shape: f32[8,1], index: 2, kind: output, shape index: {}]
  %s3 = sld [smem:[#allocation0]]
  $region18: #{tpu_custom_call.1} parent=0
    _
  %s5 = ssub.s32 1, %s3
  %s6 = scalar_select 0, %s5, %s3
  // Predicated region
  $region2: #{tpu_custom_call.1} parent=0 // pred_check
    _
  $region3: #{tpu_custom_call.1} parent=0 // pred_check_branch
    %8 = sbr.rel (0) target = $region5
  $region4: #{tpu_custom_call.1} parent=0 // pred_region
    _
  $region5: #{tpu_custom_call.1} parent=0 // pred_fallthru
    _
  // Predicated region
  $region6: #{tpu_custom_call.1} parent=0 // pred_check
    _
  $region7: #{tpu_custom_call.1} parent=0 // pred_check_branch
    %10 = sbr.rel (0) target = $region9
  $region8: #{tpu_custom_call.1} parent=0 // pred_region
    _
  $region9: #{tpu_custom_call.1} parent=0 // pred_fallthru
    _
  %v12 = vld [vmem:[%s1] sm:$0x1]
  %v13 = vld [vmem:[%s1 + $0x1] sm:$0x1]
  %v14 = vld [vmem:[%s1 + $0x2] sm:$0x1]
  %v15 = vld [vmem:[%s1 + $0x3] sm:$0x1]
  %v16 = vld [vmem:[%s1 + $0x4] sm:$0x1]
  %v17 = vld [vmem:[%s1 + $0x5] sm:$0x1]
  %v18 = vld [vmem:[%s1 + $0x6] sm:$0x1]
  %v19 = vld [vmem:[%s1 + $0x7] sm:$0x1]
  %v20 = vld [vmem:[%s1 + $0x8] sm:$0xff]
  %v21 = vld [vmem:[%s1 + $0x10] sm:$0xff]
  %v22 = vld [vmem:[%s1 + $0x18] sm:$0xff]
  %v23 = vpack.c.bf16 %v21, %v20
  %v24 = vpack.c.bf16 %v22, %v22
  %v25 = vld [vmem:[%s1 + $0x20] sm:$0xff]
  %v26 = vld [vmem:[%s1 + $0x28] sm:$0xff]
  %v27 = vld [vmem:[%s1 + $0x30] sm:$0xff]
  %v28 = vld [vmem:[%s1 + $0x38] sm:$0xff]
  %v29 = vpack.c.bf16 %v26, %v25
  %v30 = vpack.c.bf16 %v28, %v27
  %v31 = vld [vmem:[%s1 + $0x40] sm:$0xff]
  %v32 = vld [vmem:[%s1 + $0x48] sm:$0xff]
  %v33 = vld [vmem:[%s1 + $0x50] sm:$0xff]
  %v34 = vpack.c.bf16 %v32, %v31
  %v35 = vpack.c.bf16 %v33, %v33
  %v36 = vld [vmem:[%s0] sm:$0xf]
  %v37 = vlaneseq
  %v38 = vshrl.u32 %v37, 7
  %v39 = vsub.s32 0, %v38
  %v40 = vrot.slane %v12, %v39
  %vm41 = vcmask 195584
  %v43 = vsel %vm41, %v36, 0
  %vm45 = vcmask 1043456
  %v47 = vsel %vm45, %v24, 0
  %49 = vmatprep.subr.bf16.mxu0 0
  %50 = vmatpush1.bf16.msra.mxu0 0
  %51 = vmatprep.subr.bf16.mxu0 0
  %52 = vmatpush1.bf16.msra.mxu0 0
  %53 = vmatprep.subr.bf16.mxu0 0
  %54 = vmatpush1.bf16.msra.mxu0 0
  %55 = vmatprep.subr.bf16.mxu0 0
  %56 = vmatpush1.bf16.msra.mxu0 0
  %57 = vmatprep.subr.bf16.mxu0 0
  %58 = vmatpush1.bf16.msra.mxu0 0
  %59 = vmatprep.subr.bf16.mxu0 0
  %60 = vmatpush1.bf16.msra.mxu0 0
  %61 = vmatprep.subr.bf16.mxu0 0
  %62 = vmatpush1.bf16.msra.mxu0 %v47
  %63 = vmatprep.subr.bf16.mxu0 0
  %64 = vmatpush1.bf16.msra.mxu0 %v23
  %65 = vmatprep.subr.bf16.mxu0 0
  %66 = vmatpush2.bf16.msra.mxu0 0
  %67 = vmatprep.subr.bf16.mxu0 0
  %68 = vmatpush2.bf16.msra.mxu0 0
  %69 = vmatprep.subr.bf16.mxu0 0
  %70 = vmatpush2.bf16.msra.mxu0 0
  %71 = vmatprep.subr.bf16.mxu0 0
  %72 = vmatpush2.bf16.msra.mxu0 0
  %73 = vmatprep.subr.bf16.mxu0 0
  %74 = vmatpush2.bf16.msra.mxu0 0
  %75 = vmatprep.subr.bf16.mxu0 0
  %76 = vmatpush2.bf16.msra.mxu0 0
  %77 = vmatprep.subr.bf16.mxu0 0
  %78 = vmatpush2.bf16.msra.mxu0 0
  %79 = vmatprep.subr.bf16.mxu0 0
  %80 = vmatpush2.bf16.msra.mxu0 0
  %81 = vmatprep.mubr.bf16.mxu0 0
  %82 = vmatmul.mubr.bf16.gmra.mxu0 %v43
  %v83 = vpop.f32.mrf.mxu0
  %v84 = vadd.f32 %v40, %v83
  %v85 = vpop.f32.mrf.mxu0
  %v86 = vpop.f32.mrf.mxu0
  %v87 = vpop.f32.mrf.mxu0
  %88 = vdwg.mxu0
  %vm89 = vcmask 261120
  %v90 = vsel %vm89, %v84, 0.0
  %v91 = vrot.slane %v90, 4
  %v92 = vadd.f32 %v90, %v91
  %v93 = vrot.slane %v92, 2
  %v94 = vadd.f32 %v92, %v93
  %v95 = vrot.slane %v94, 1
  %v96 = vadd.f32 %v94, %v95
  %v97 = vrcp.pop 8.0
  %v98 = vmul.f32 %v96, %v97
  %v99 = vmul.f32 %v84, %v84
  %v100 = vsel %vm89, %v99, 0.0
  %v101 = vrot.slane %v100, 4
  %v102 = vadd.f32 %v100, %v101
  %v103 = vrot.slane %v102, 2
  %v104 = vadd.f32 %v102, %v103
  %v105 = vrot.slane %v104, 1
  %v106 = vadd.f32 %v104, %v105
  %v107 = vmul.f32 %v106, %v97
  %v108 = vmul.f32 %v98, %v98
  %v109 = vsub.f32 %v107, %v108
  %v110 = vmax.f32 %v109, 0.0
  %v111 = vadd.f32 %v110, 1e-05
  %v112 = vrsqrt.pop %v111
  %v113 = vmul.f32 %v112, %v13
  %v114 = vmul.f32 %v98, %v113
  %v115 = vsub.f32 %v14, %v114
  %v116 = vlaneseq
  %v117 = vshrl.u32 %v116, 7
  %v118 = vsub.s32 0, %v117
  %v119 = vrot.slane %v113, %v118
  %v120 = vmul.f32 %v84, %v119
  %v121 = vlaneseq
  %v122 = vshrl.u32 %v121, 7
  %v123 = vsub.s32 0, %v122
  %v124 = vrot.slane %v115, %v123
  %v125 = vadd.f32 %v120, %v124
  %v126 = vsel %vm89, %v125, 0.0
  %127 = vadd.xlane.f32.xlu0 %v126
  %v128 = vpop.xlane.xlu0 %127
  %v129 = vrcp.pop 32.0
  %v130 = vmul.f32 %v128, %v129
  %v131 = vmul.f32 %v125, %v125
  %v132 = vsel %vm89, %v131, 0.0
  %133 = vadd.xlane.f32.xlu0 %v132
  %v134 = vpop.xlane.xlu0 %133
  %v135 = vmul.f32 %v134, %v129
  %v136 = vmul.f32 %v130, %v130
  %v137 = vsub.f32 %v135, %v136
  %v138 = vmax.f32 %v137, 0.0
  %v139 = vsub.f32 %v125, %v130
  %v140 = vadd.f32 %v138, 1e-05
  %v141 = vrsqrt.pop %v140
  %v142 = vmul.f32 %v139, %v141
  %v143 = vlaneseq
  %v144 = vshrl.u32 %v143, 7
  %v145 = vsub.s32 0, %v144
  %v146 = vrot.slane %v15, %v145
  %v147 = vmul.f32 %v142, %v146
  %v148 = vlaneseq
  %v149 = vshrl.u32 %v148, 7
  %v150 = vsub.s32 0, %v149
  %v151 = vrot.slane %v16, %v150
  %v152 = vadd.f32 %v147, %v151
  %v153 = vmax.f32 %v152, 0.0
  %v154 = vpack.c.bf16 %v153, %v153
  %v156 = vsel %vm45, %v35, 0
  %158 = vmatprep.subr.bf16.mxu0 0
  %159 = vmatpush1.bf16.msra.mxu0 0
  %160 = vmatprep.subr.bf16.mxu0 0
  %161 = vmatpush1.bf16.msra.mxu0 0
  %162 = vmatprep.subr.bf16.mxu0 0
  %163 = vmatpush1.bf16.msra.mxu0 0
  %164 = vmatprep.subr.bf16.mxu0 0
  %165 = vmatpush1.bf16.msra.mxu0 0
  %166 = vmatprep.subr.bf16.mxu0 0
  %167 = vmatpush1.bf16.msra.mxu0 0
  %168 = vmatprep.subr.bf16.mxu0 0
  %169 = vmatpush1.bf16.msra.mxu0 0
  %170 = vmatprep.subr.bf16.mxu0 0
  %171 = vmatpush1.bf16.msra.mxu0 %v156
  %172 = vmatprep.subr.bf16.mxu0 0
  %173 = vmatpush1.bf16.msra.mxu0 %v34
  %174 = vmatprep.subr.bf16.mxu0 0
  %175 = vmatpush2.bf16.msra.mxu0 0
  %176 = vmatprep.subr.bf16.mxu0 0
  %177 = vmatpush2.bf16.msra.mxu0 0
  %178 = vmatprep.subr.bf16.mxu0 0
  %179 = vmatpush2.bf16.msra.mxu0 0
  %180 = vmatprep.subr.bf16.mxu0 0
  %181 = vmatpush2.bf16.msra.mxu0 0
  %182 = vmatprep.subr.bf16.mxu0 0
  %183 = vmatpush2.bf16.msra.mxu0 0
  %184 = vmatprep.subr.bf16.mxu0 0
  %185 = vmatpush2.bf16.msra.mxu0 0
  %186 = vmatprep.subr.bf16.mxu0 0
  %187 = vmatpush2.bf16.msra.mxu0 0
  %188 = vmatprep.subr.bf16.mxu0 0
  %189 = vmatpush2.bf16.msra.mxu0 0
  %190 = vmatprep.mubr.bf16.mxu0 0
  %191 = vmatmul.mubr.bf16.gmra.mxu0 %v43
  %v192 = vpop.f32.mrf.mxu0
  %v193 = vadd.f32 0.0, %v192
  %v194 = vpop.f32.mrf.mxu0
  %v195 = vpop.f32.mrf.mxu0
  %v196 = vpop.f32.mrf.mxu0
  %197 = vdwg.mxu0
  %v199 = vsel %vm89, %v154, 0
  %201 = vmatprep.subr.bf16.mxu0 0
  %202 = vmatpush1.bf16.msra.mxu0 0
  %203 = vmatprep.subr.bf16.mxu0 0
  %204 = vmatpush1.bf16.msra.mxu0 0
  %205 = vmatprep.subr.bf16.mxu0 0
  %206 = vmatpush1.bf16.msra.mxu0 0
  %207 = vmatprep.subr.bf16.mxu0 0
  %208 = vmatpush1.bf16.msra.mxu0 0
  %209 = vmatprep.subr.bf16.mxu0 0
  %210 = vmatpush1.bf16.msra.mxu0 0
  %211 = vmatprep.subr.bf16.mxu0 0
  %212 = vmatpush1.bf16.msra.mxu0 0
  %213 = vmatprep.subr.bf16.mxu0 0
  %214 = vmatpush1.bf16.msra.mxu0 %v30
  %215 = vmatprep.subr.bf16.mxu0 0
  %216 = vmatpush1.bf16.msra.mxu0 %v29
  %217 = vmatprep.subr.bf16.mxu0 0
  %218 = vmatpush2.bf16.msra.mxu0 0
  %219 = vmatprep.subr.bf16.mxu0 0
  %220 = vmatpush2.bf16.msra.mxu0 0
  %221 = vmatprep.subr.bf16.mxu0 0
  %222 = vmatpush2.bf16.msra.mxu0 0
  %223 = vmatprep.subr.bf16.mxu0 0
  %224 = vmatpush2.bf16.msra.mxu0 0
  %225 = vmatprep.subr.bf16.mxu0 0
  %226 = vmatpush2.bf16.msra.mxu0 0
  %227 = vmatprep.subr.bf16.mxu0 0
  %228 = vmatpush2.bf16.msra.mxu0 0
  %229 = vmatprep.subr.bf16.mxu0 0
  %230 = vmatpush2.bf16.msra.mxu0 0
  %231 = vmatprep.subr.bf16.mxu0 0
  %232 = vmatpush2.bf16.msra.mxu0 0
  %233 = vmatprep.mubr.bf16.mxu0 0
  %234 = vmatmul.mubr.bf16.gmra.mxu0 %v199
  %v235 = vpop.f32.mrf.mxu0
  %v236 = vadd.f32 %v193, %v235
  %v237 = vpop.f32.mrf.mxu0
  %v238 = vpop.f32.mrf.mxu0
  %v239 = vpop.f32.mrf.mxu0
  %240 = vdwg.mxu0
  %v241 = vlaneseq
  %v242 = vshrl.u32 %v241, 7
  %v243 = vsub.s32 0, %v242
  %v244 = vrot.slane %v17, %v243
  %v245 = vadd.f32 %v236, %v244
  %v246 = vmax.f32 %v245, 0.0
  %v247 = vlaneseq
  %v248 = vshrl.u32 %v247, 7
  %v249 = vsub.s32 0, %v248
  %v250 = vrot.slane %v18, %v249
  %v251 = vmul.f32 %v246, %v250
  %vm252 = vcmask 130048
  %v253 = vsel %vm252, %v251, 0.0
  %254 = vadd.xlane.f32.xlu0 %v253
  %v255 = vpop.xlane.xlu0 %254
  %v256 = vlaneseq
  %v257 = vshrl.u32 %v256, 7
  %v258 = vsub.s32 0, %v257
  %v259 = vrot.slane %v19, %v258
  %v260 = vadd.f32 %v255, %v259
  %vm261 = vcmask 7168
  %262 = vst.msk [vmem:[%s2] sm:$0xff] %vm261, %v260
  // Predicated region
  $region10: #{tpu_custom_call.1} parent=0 // pred_check
    _
  $region11: #{tpu_custom_call.1} parent=0 // pred_check_branch
    %264 = sbr.rel (0) target = $region13
  $region12: #{tpu_custom_call.1} parent=0 // pred_region
    _
  $region13: #{tpu_custom_call.1} parent=0 // pred_fallthru
    _
  // Predicated region
  $region14: #{tpu_custom_call.1} parent=0 // pred_check
    _
  $region15: #{tpu_custom_call.1} parent=0 // pred_check_branch
    %266 = sbr.rel (0) target = $region17
  $region16: #{tpu_custom_call.1} parent=0 // pred_region
    _
  $region17: #{tpu_custom_call.1} parent=0 // pred_fallthru
    _

</llo_original>
